<compile_context>
chip_gen: v6e
topology: v6e:2x2x1
jax: 0.10.0
libtpu: 0.0.40
codegen_flags: <defaults>
</compile_context>

<pallas_src>
import jax
import jax.numpy as jnp
from jax import lax
from jax.experimental import pallas as pl
from jax.experimental.pallas import tpu as pltpu


def _round_up(x: int, m: int) -> int:
    return (x + m - 1) // m * m


# ----------------------------- Pallas kernel ------------------------------ #
def _patch_embed_kernel(a_ref, w_ref, b_ref, o_ref):
    # a_ref: [TM, K]   bf16 patch tile (streamed / double-buffered over M)
    # w_ref: [K,  Np]  bf16 projection (grid-invariant index_map -> VMEM resident)
    # b_ref: [1,  Np]  f32 bias        (grid-invariant index_map -> VMEM resident)
    # o_ref: [TM, Np]  bf16 output tile
    acc = jnp.dot(a_ref[...], w_ref[...], preferred_element_type=jnp.float32)
    o_ref[...] = (acc + b_ref[...]).astype(o_ref.dtype)   # single vadd + cast epilogue


def _patch_embed_matmul(patches, w2d, bias2d, *, max_tm=1024, out_dtype=jnp.bfloat16):
    """patches: [M, K] bf16, w2d: [K, N] bf16, bias2d: [1, N] f32 -> [M, N] out_dtype."""
    M, K = patches.shape
    Kw, N = w2d.shape
    assert K == Kw and bias2d.shape == (1, N)

    # Pad only the (tiny) weight/bias along N to a lane-dense multiple of 128.
    # For realistic embed dims (multiples of 128) this is a no-op.
    N_pad = _round_up(N, 128)
    w = w2d if N_pad == N else jnp.pad(w2d, ((0, 0), (0, N_pad - N)))
    b = bias2d if N_pad == N else jnp.pad(bias2d, ((0, 0), (0, N_pad - N)))

    # M tile: multiple of 8 (sublane), large to amortize per-step overhead.
    # No padding of the activations: ragged last M tile is masked by Pallas.
    tm = min(max_tm, _round_up(M, 8))
    grid_m = pl.cdiv(M, tm)

    out_itemsize = jnp.dtype(out_dtype).itemsize
    cost = pl.CostEstimate(
        flops=2 * M * K * N_pad,
        transcendentals=0,
        bytes_accessed=(M * K * patches.dtype.itemsize          # A read (once)
                        + K * N_pad * w.dtype.itemsize           # W read (once, resident)
                        + N_pad * 4                               # bias read (once)
                        + M * N_pad * out_itemsize))              # output write

    out = pl.pallas_call(
        _patch_embed_kernel,
        out_shape=jax.ShapeDtypeStruct((M, N_pad), out_dtype),
        grid=(grid_m,),
        in_specs=[
            pl.BlockSpec((tm, K), lambda i: (i, 0)),       # A: streams over M
            pl.BlockSpec((K, N_pad), lambda i: (0, 0)),    # W: grid-invariant -> resident
            pl.BlockSpec((1, N_pad), lambda i: (0, 0)),    # bias: grid-invariant -> resident
        ],
        out_specs=pl.BlockSpec((tm, N_pad), lambda i: (i, 0)),
        compiler_params=pltpu.CompilerParams(
            dimension_semantics=("parallel",),             # M tiles split across TCs (v7x)
            vmem_limit_bytes=32 * 1024 * 1024),
        cost_estimate=cost,
    )(patches, w, b)

    if N_pad != N:
        out = out[:, :N]
    return out


# ----------------------------- Module wrapper ------------------------------ #
class ImagePatchPallas:
    """JAX/Pallas equivalent of ImagePatch (default path: single Conv2d proj,
    flatten=True, norm=None, multi_conv=False)."""

    def __init__(self, embed_dim=32, img_sz=16, patch_sz=8, bias=True, key=None,
                 out_dtype=jnp.bfloat16):
        self.embed_dim = embed_dim
        self.img_size = (img_sz, img_sz)
        self.patch_size = (patch_sz, patch_sz)
        self.grid_size = (img_sz // patch_sz, img_sz // patch_sz)
        self.num_patches = self.grid_size[0] * self.grid_size[1]
        self.in_chs = 3
        self.out_dtype = out_dtype   # bf16 by default (halves output HBM writes)

        # Deterministic parameter init (mirrors nn.Conv2d parameter shapes).
        key = jax.random.PRNGKey(0) if key is None else key
        kw, kb = jax.random.split(key)
        fan_in = self.in_chs * patch_sz * patch_sz
        bound = 1.0 / (fan_in ** 0.5)
        # conv weight: [embed_dim, C, ph, pw] (OIHW, matches PyTorch)
        self.weight = jax.random.uniform(
            kw, (embed_dim, self.in_chs, patch_sz, patch_sz),
            minval=-bound, maxval=bound, dtype=jnp.float32)
        self.bias = (jax.random.uniform(kb, (embed_dim,), minval=-bound,
                                        maxval=bound, dtype=jnp.float32)
                     if bias else jnp.zeros((embed_dim,), jnp.float32))
        # TODO(synk): multi_conv / norm branches not implemented (default args use neither).

    def __call__(self, x):
        # x: [B, C, H, W] (NCHW, matches PyTorch).
        B, C, H, W = x.shape
        assert H == self.img_size[0], f"Wrong image height! Expected {self.img_size[0]} got {H}"
        assert W == self.img_size[1], f"Wrong image width! Expected {self.img_size[1]} got {W}"
        ph, pw = self.patch_size
        gh, gw = self.grid_size

        # NCHW -> [B*num_patches, C*ph*pw], flattened in (C, ph, pw) order to match
        # the OIHW conv weight.  Cast to bf16 BEFORE the transpose so XLA fuses the
        # cast into the im2col copy (reads f32 once, writes half the bytes).
        # TODO(synk): fully fuse this im2col into the Pallas kernel (BlockSpec on raw
        # NCHW slabs + in-VMEM XLU reorder) to remove this remaining HBM pass.
        patches = x.astype(jnp.bfloat16).reshape(B, C, gh, ph, gw, pw)
        patches = jnp.transpose(patches, (0, 2, 4, 1, 3, 5))
        patches = patches.reshape(B * gh * gw, C * ph * pw)

        # Conv weight [E, C, ph, pw] -> [C*ph*pw, E] (same flatten order), bf16 for MXU.
        w2d = self.weight.reshape(self.embed_dim, C * ph * pw).T.astype(jnp.bfloat16)
        bias2d = self.bias.reshape(1, self.embed_dim).astype(jnp.float32)

        out = _patch_embed_matmul(patches, w2d, bias2d,
                                  out_dtype=self.out_dtype)      # [B*P, E]
        return out.reshape(B, self.num_patches, self.embed_dim)  # [B, P, E]


# --------------------------------- main ------------------------------------ #
if __name__ == "__main__":
    key = jax.random.PRNGKey(0)
    kx, kp = jax.random.split(key)

    # Small shapes consistent with the module: B=2, C=3 (fixed in_chs), 16x16 img,
    # patch 8 -> 4 patches, embed_dim=32.
    B, C, H, W = 2, 3, 16, 16
    x = jax.random.normal(kx, (B, C, H, W), dtype=jnp.float32)

    model = ImagePatchPallas(embed_dim=32, img_sz=16, patch_sz=8, bias=True, key=kp)
    out = model(x)
    out = jax.block_until_ready(out)
    assert out.shape == (B, model.num_patches, model.embed_dim)
    out_f32 = out.astype(jnp.float32)

    ph, pw = model.patch_size
    gh, gw = model.grid_size
    E = model.embed_dim

    # Reference 1: mirror of the kernel math (bf16 inputs, f32 accumulation).
    pr = x.astype(jnp.bfloat16).reshape(B, C, gh, ph, gw, pw).transpose(0, 2, 4, 1, 3, 5)
    pr = pr.reshape(B * gh * gw, C * ph * pw)
    wr = model.weight.reshape(E, C * ph * pw).T.astype(jnp.bfloat16)
    ref_bf16 = jnp.dot(pr, wr, preferred_element_type=jnp.float32) + model.bias[None, :]
    ref_bf16 = ref_bf16.reshape(B, model.num_patches, E)
    assert jnp.allclose(out_f32, ref_bf16, atol=2e-2, rtol=2e-2), "mismatch vs bf16 reference"

    # Reference 2: original f32 strided conv semantics (looser tol due to bf16 in/out).
    ref = lax.conv_general_dilated(
        x, model.weight, window_strides=model.patch_size, padding="VALID",
        dimension_numbers=("NCHW", "OIHW", "NCHW"))
    ref = ref + model.bias[None, :, None, None]
    ref = ref.reshape(B, E, -1).transpose(0, 2, 1)
    assert jnp.allclose(out_f32, ref, atol=5e-2, rtol=5e-2), "mismatch vs f32 conv reference"

    print("KERNEL_OK")
</pallas_src>

<mosaic_0001>
module attributes {stable_mosaic.version = 11 : i64} {
  func.func @_patch_embed_kernel(%arg0: i32, %arg1: memref<8x192xbf16, #tpu.memory_space<vmem>>, %arg2: memref<192x128xbf16, #tpu.memory_space<vmem>>, %arg3: memref<1x128xf32, #tpu.memory_space<vmem>>, %arg4: memref<8x128xbf16, #tpu.memory_space<vmem>>) attributes {dimension_semantics = [#tpu.dimension_semantics<parallel>], iteration_bounds = array<i64: 1>, scalar_prefetch = 0 : i64, scratch_operands = 0 : i64, tpu.core_type = #tpu.core_type<tc>, window_params = [{transform_indices = @transform_0, window_bounds = array<i64: 8, 192>}, {pipeline_mode = #tpu.pipeline_mode<synchronous>, transform_indices = @transform_1, window_bounds = array<i64: 192, 128>}, {pipeline_mode = #tpu.pipeline_mode<synchronous>, transform_indices = @transform_2, window_bounds = array<i64: 1, 128>}, {transform_indices = @transform_3, window_bounds = array<i64: 8, 128>}]} {
    %c0 = arith.constant 0 : index
    %c0_0 = arith.constant 0 : index
    %0 = vector.load %arg1[%c0, %c0_0] : memref<8x192xbf16, #tpu.memory_space<vmem>>, vector<8x192xbf16>
    %c0_1 = arith.constant 0 : index
    %c0_2 = arith.constant 0 : index
    %1 = vector.load %arg2[%c0_1, %c0_2] : memref<192x128xbf16, #tpu.memory_space<vmem>>, vector<192x128xbf16>
    %cst = arith.constant dense<0.000000e+00> : vector<8x128xf32>
    %2 = tpu.matmul %0, %1, %cst {dimension_numbers = #tpu.dot_dimension_numbers<[1], [0], [0], [1], [0, 0, 1, 1], [], []>} : vector<8x192xbf16>, vector<192x128xbf16>, vector<8x128xf32> -> vector<8x128xf32>
    %c0_3 = arith.constant 0 : index
    %c0_4 = arith.constant 0 : index
    %3 = vector.load %arg3[%c0_3, %c0_4] : memref<1x128xf32, #tpu.memory_space<vmem>>, vector<1x128xf32>
    %4 = vector.broadcast %3 : vector<1x128xf32> to vector<8x128xf32>
    %5 = arith.addf %2, %4 : vector<8x128xf32>
    %6 = arith.truncf %5 : vector<8x128xf32> to vector<8x128xbf16>
    %c0_5 = arith.constant 0 : index
    %c0_6 = arith.constant 0 : index
    %7 = vector.load %arg4[%c0_5, %c0_6] : memref<8x128xbf16, #tpu.memory_space<vmem>>, vector<8x128xbf16>
    tpu.vector_store %arg4[%c0_5, %c0_6], %6 {strides = array<i32>} : memref<8x128xbf16, #tpu.memory_space<vmem>>, vector<8x128xbf16>,
    return
  }
  func.func @transform_0(%arg0: i32) -> (i32, i32) {
    %c0_i32 = arith.constant 0 : i32
    %c0_i32_0 = arith.constant 0 : i32
    return %arg0, %c0_i32 : i32, i32
  }
  func.func @transform_1(%arg0: i32) -> (i32, i32) {
    %c0_i32 = arith.constant 0 : i32
    %c0_i32_0 = arith.constant 0 : i32
    %c0_i32_1 = arith.constant 0 : i32
    return %c0_i32, %c0_i32_0 : i32, i32
  }
  func.func @transform_2(%arg0: i32) -> (i32, i32) {
    %c0_i32 = arith.constant 0 : i32
    %c0_i32_0 = arith.constant 0 : i32
    %c0_i32_1 = arith.constant 0 : i32
    return %c0_i32, %c0_i32_0 : i32, i32
  }
  func.func @transform_3(%arg0: i32) -> (i32, i32) {
    %c0_i32 = arith.constant 0 : i32
    %c0_i32_0 = arith.constant 0 : i32
    return %arg0, %c0_i32 : i32, i32
  }
}

</mosaic_0001>

<llo_original>
// kernel: tpu_custom_call.1
$region0: #{tpu_custom_call.1}
  #allocation0 [shape = 'u32[]', space=smem, size = 0x4, offset = 0x4, fixed_abs, tag = 'smem constant byte address 0x4 - core index']
  #allocation1 [shape = 'u32[144,128]{1,0:T(1,128)}', space=vmem, size = 0x12000, scoped, tag = 'internal scratch']
  %s0 = inlined_call_operand.hbm [shape: bf16[8,192], index: 0, kind: input, shape index: {}]
  %s1 = inlined_call_operand.hbm [shape: bf16[192,128], index: 1, kind: input, shape index: {}]
  %s2 = inlined_call_operand.vmem [shape: f32[1,128], index: 2, kind: input, shape index: {}]
  %s3 = inlined_call_operand.hbm [shape: bf16[8,128], index: 3, kind: output, shape index: {}]
  %s4 = sld [smem:[#allocation0]]
  $region30: #{tpu_custom_call.1} parent=0
    _
  %s6 = ssub.s32 1, %s4
  %s7 = scalar_select 0, %s6, %s4
  $region1: #{tpu_custom_call.1} parent=0
    #allocation2 [shape = 'u8[4096]{0}', space=vmem, size = 0x1000, scoped, tag = 'input window, operand 0, single buffered']
    #allocation3 [shape = 's32[1]{0}', space=sflag, size = 0x4, scoped, tag = 'scoped memory for tpu_custom_call.1']
    #allocation4 [shape = 's32[1]{0}', space=sflag, size = 0x4, scoped, tag = 'scoped memory for tpu_custom_call.1']
    #allocation5 [shape = 'u8[49152]{0}', space=vmem, size = 0xc000, scoped, tag = 'input window, operand 1, single buffered']
    #allocation6 [shape = 's32[1]{0}', space=sflag, size = 0x4, scoped, tag = 'scoped memory for tpu_custom_call.1']
    #allocation7 [shape = 'u8[2048]{0}', space=vmem, size = 0x800, scoped, tag = 'output window, operand 0, single buffered']
    %8 = vsyncpa [#allocation3], 0
    %9 = vsyncpa [#allocation6], 0
    %10 = vsyncpa [#allocation4], 0
    // Predicated region
    $region2: #{tpu_custom_call.1} parent=1 // pred_check
      _
    $region3: #{tpu_custom_call.1} parent=1 // pred_check_branch
      %12 = sbr.rel (0) target = $region5
    $region4: #{tpu_custom_call.1} parent=1 // pred_region
      %s14 = ssub.s32 128, 128
      %15 = vsyncadd [#allocation3], %s14
      %s17 = sshll.u32 [#allocation2], 4
      %s18 = int_to_ptr.vmem [resolvable:$true] %s17
      %20 = dma.hbm_to_vmem [thread:$0]  %s0, 128, %s18, [#allocation3]
    $region5: #{tpu_custom_call.1} parent=1 // pred_fallthru
      _
    // Predicated region
    $region6: #{tpu_custom_call.1} parent=1 // pred_check
      _
    $region7: #{tpu_custom_call.1} parent=1 // pred_check_branch
      %22 = sbr.rel (0) target = $region9
    $region8: #{tpu_custom_call.1} parent=1 // pred_region
      %s24 = ssub.s32 1536, 1536
      %25 = vsyncadd [#allocation6], %s24
      %s26 = sshll.u32 [#allocation5], 4
      %s27 = int_to_ptr.vmem [resolvable:$true] %s26
      %32 = dma.hbm_to_vmem [thread:$0]  %s1, 1536, %s27, [#allocation6], 64, 64, 4
    $region9: #{tpu_custom_call.1} parent=1 // pred_fallthru
      _
    // Predicated region
    $region10: #{tpu_custom_call.1} parent=1 // pred_check
      _
    $region11: #{tpu_custom_call.1} parent=1 // pred_check_branch
      %34 = sbr.rel (0) target = $region13
    $region12: #{tpu_custom_call.1} parent=1 // pred_region
      _
    $region13: #{tpu_custom_call.1} parent=1 // pred_fallthru
      _
    // Predicated region
    $region14: #{tpu_custom_call.1} parent=1 // pred_check
      _
    $region15: #{tpu_custom_call.1} parent=1 // pred_check_branch
      %36 = sbr.rel (0) target = $region17
    $region16: #{tpu_custom_call.1} parent=1 // pred_region
      %37 = dma.done [#allocation3], 128
    $region17: #{tpu_custom_call.1} parent=1 // pred_fallthru
      _
    // Predicated region
    $region18: #{tpu_custom_call.1} parent=1 // pred_check
      _
    $region19: #{tpu_custom_call.1} parent=1 // pred_check_branch
      %39 = sbr.rel (0) target = $region21
    $region20: #{tpu_custom_call.1} parent=1 // pred_region
      %40 = dma.done [#allocation6], 1536
    $region21: #{tpu_custom_call.1} parent=1 // pred_fallthru
      _
    %v42 = vld [vmem:[#allocation2] sm:$0xff]
    %v43 = vld [vmem:[#allocation5] sm:$0xf]
    %v44 = vld [vmem:[#allocation5 + $0x4] sm:$0xf]
    %v45 = vld [vmem:[#allocation5 + $0x8] sm:$0xf]
    %v46 = vld [vmem:[#allocation5 + $0xc] sm:$0xf]
    %v47 = vld [vmem:[#allocation5 + $0x10] sm:$0xf]
    %v48 = vld [vmem:[#allocation5 + $0x14] sm:$0xf]
    %v49 = vld [vmem:[#allocation5 + $0x18] sm:$0xf]
    %v50 = vld [vmem:[#allocation5 + $0x1c] sm:$0xf]
    %v51 = vld [vmem:[#allocation5 + $0x20] sm:$0xf]
    %v52 = vld [vmem:[#allocation5 + $0x24] sm:$0xf]
    %v53 = vld [vmem:[#allocation5 + $0x28] sm:$0xf]
    %v54 = vld [vmem:[#allocation5 + $0x2c] sm:$0xf]
    %v55 = vld [vmem:[#allocation5 + $0x30] sm:$0xf]
    %v56 = vld [vmem:[#allocation5 + $0x34] sm:$0xf]
    %v57 = vld [vmem:[#allocation5 + $0x38] sm:$0xf]
    %v58 = vld [vmem:[#allocation5 + $0x3c] sm:$0xf]
    %v59 = vld [vmem:[#allocation5 + $0x40] sm:$0xf]
    %v60 = vld [vmem:[#allocation5 + $0x44] sm:$0xf]
    %v61 = vld [vmem:[#allocation5 + $0x48] sm:$0xf]
    %v62 = vld [vmem:[#allocation5 + $0x4c] sm:$0xf]
    %v63 = vld [vmem:[#allocation5 + $0x50] sm:$0xf]
    %v64 = vld [vmem:[#allocation5 + $0x54] sm:$0xf]
    %v65 = vld [vmem:[#allocation5 + $0x58] sm:$0xf]
    %v66 = vld [vmem:[#allocation5 + $0x5c] sm:$0xf]
    %v67 = vld [vmem:[%s2] sm:$0x1]
    %v69 = vlaneseq
    %v70 = vshrl.u32 %v69, 7
    %v71 = vsub.s32 0, %v70
    %v72 = vrot.slane %v67, %v71
    %v75 = vunpack.c.l.b16 %v42
    %v76 = vunpack.c.h.b16 %v42
    %v77 = vpack.c.b16 %v75, %v75
    %v78 = vpack.c.b16 %v76, %v76
    %v104 = vunpack.c.l.b16 %v43
    %v105 = vunpack.c.l.b16 %v44
    %v106 = vunpack.c.l.b16 %v45
    %v107 = vunpack.c.l.b16 %v46
    %v108 = vunpack.c.l.b16 %v47
    %v109 = vunpack.c.l.b16 %v48
    %v110 = vunpack.c.l.b16 %v49
    %v111 = vunpack.c.l.b16 %v50
    %v112 = vunpack.c.l.b16 %v51
    %v113 = vunpack.c.l.b16 %v52
    %v114 = vunpack.c.l.b16 %v53
    %v115 = vunpack.c.l.b16 %v54
    %v116 = vunpack.c.l.b16 %v55
    %v117 = vunpack.c.l.b16 %v56
    %v118 = vunpack.c.l.b16 %v57
    %v119 = vunpack.c.l.b16 %v58
    %v120 = vunpack.c.l.b16 %v59
    %v121 = vunpack.c.l.b16 %v60
    %v122 = vunpack.c.l.b16 %v61
    %v123 = vunpack.c.l.b16 %v62
    %v124 = vunpack.c.l.b16 %v63
    %v125 = vunpack.c.l.b16 %v64
    %v126 = vunpack.c.l.b16 %v65
    %v127 = vunpack.c.l.b16 %v66
    %v128 = vpack.c.b16 %v105, %v104
    %v129 = vpack.c.b16 %v107, %v106
    %v130 = vpack.c.b16 %v109, %v108
    %v131 = vpack.c.b16 %v111, %v110
    %v132 = vpack.c.b16 %v113, %v112
    %v133 = vpack.c.b16 %v115, %v114
    %v134 = vpack.c.b16 %v117, %v116
    %v135 = vpack.c.b16 %v119, %v118
    %v136 = vpack.c.b16 %v121, %v120
    %v137 = vpack.c.b16 %v123, %v122
    %v138 = vpack.c.b16 %v125, %v124
    %v139 = vpack.c.b16 %v127, %v126
    %vm152 = vcmask 523264
    %v154 = vsel %vm152, %v78, 0
    %156 = vmatprep.subr.bf16.mxu0 0
    %157 = vmatpush1.bf16.msra.mxu0 %v135
    %158 = vmatprep.subr.bf16.mxu0 0
    %159 = vmatpush1.bf16.msra.mxu0 %v134
    %160 = vmatprep.subr.bf16.mxu0 0
    %161 = vmatpush1.bf16.msra.mxu0 %v133
    %162 = vmatprep.subr.bf16.mxu0 0
    %163 = vmatpush1.bf16.msra.mxu0 %v132
    %164 = vmatprep.subr.bf16.mxu0 0
    %165 = vmatpush1.bf16.msra.mxu0 %v131
    %166 = vmatprep.subr.bf16.mxu0 0
    %167 = vmatpush1.bf16.msra.mxu0 %v130
    %168 = vmatprep.subr.bf16.mxu0 0
    %169 = vmatpush1.bf16.msra.mxu0 %v129
    %170 = vmatprep.subr.bf16.mxu0 0
    %171 = vmatpush1.bf16.msra.mxu0 %v128
    %172 = vmatprep.subr.bf16.mxu0 0
    %173 = vmatpush2.bf16.msra.mxu0 0
    %174 = vmatprep.subr.bf16.mxu0 0
    %175 = vmatpush2.bf16.msra.mxu0 0
    %176 = vmatprep.subr.bf16.mxu0 0
    %177 = vmatpush2.bf16.msra.mxu0 0
    %178 = vmatprep.subr.bf16.mxu0 0
    %179 = vmatpush2.bf16.msra.mxu0 0
    %180 = vmatprep.subr.bf16.mxu0 0
    %181 = vmatpush2.bf16.msra.mxu0 %v139
    %182 = vmatprep.subr.bf16.mxu0 0
    %183 = vmatpush2.bf16.msra.mxu0 %v138
    %184 = vmatprep.subr.bf16.mxu0 0
    %185 = vmatpush2.bf16.msra.mxu0 %v137
    %186 = vmatprep.subr.bf16.mxu0 0
    %187 = vmatpush2.bf16.msra.mxu0 %v136
    %188 = vmatprep.mubr.bf16.mxu0 %v154
    %189 = vmatmul.mubr.bf16.gmra.mxu0 %v77
    %v190 = vpop.f32.mrf.mxu0
    %v191 = vadd.f32 %v72, %v190
    %v192 = vpop.f32.mrf.mxu0
    %v193 = vpop.f32.mrf.mxu0
    %v194 = vpop.f32.mrf.mxu0
    %195 = vdwg.mxu0
    %v196 = vpack.c.bf16 %v191, %v191
    %197 = vst [vmem:[#allocation7] sm:$0xf] %v196
    // Predicated region
    $region22: #{tpu_custom_call.1} parent=1 // pred_check
      _
    $region23: #{tpu_custom_call.1} parent=1 // pred_check_branch
      %199 = sbr.rel (0) target = $region25
    $region24: #{tpu_custom_call.1} parent=1 // pred_region
      %s201 = ssub.s32 64, 64
      %202 = vsyncadd [#allocation4], %s201
      %s204 = sshll.u32 [#allocation7], 4
      %s205 = int_to_ptr.vmem [resolvable:$true] %s204
      %207 = dma.vmem_to_hbm [thread:$0]  %s205, 64, %s3, [#allocation4]
    $region25: #{tpu_custom_call.1} parent=1 // pred_fallthru
      _
    // Predicated region
    $region26: #{tpu_custom_call.1} parent=1 // pred_check
      _
    $region27: #{tpu_custom_call.1} parent=1 // pred_check_branch
      %209 = sbr.rel (0) target = $region29
    $region28: #{tpu_custom_call.1} parent=1 // pred_region
      %210 = dma.done [#allocation4], 64
    $region29: #{tpu_custom_call.1} parent=1 // pred_fallthru
      _
    %211 = vsyncpa [#allocation3], 1
    %212 = vsyncpa [#allocation6], 1
    %213 = vsyncpa [#allocation4], 1

</llo_original>
